<compile_context>
chip_gen: v7x
topology: tpu7x:2x2x1
jax: 0.10.0
libtpu: 0.0.40
codegen_flags: <defaults>
</compile_context>

<pallas_src>
import jax
import jax.numpy as jnp
import numpy as np
from jax.experimental import pallas as pl
from jax.experimental.pallas import tpu as pltpu

H1, H2 = 1000, 200          # logical hidden sizes (match the PyTorch module)
H1_PAD, H2_PAD = 1024, 256  # 128-aligned padded hidden sizes
HEAD_PAD = 128              # fused head lanes: [mean(2) | depth(1) | log_std(out) | 0-pad]


def mlp_kernel(x_ref, w1_ref, b1_ref, w2_ref, b2_ref,
               wh_ref, bh_ref, mask_ref, out_ref):
    x = x_ref[...]

    # fc1 + relu  (K = input_size, N = 1024)
    h1 = jnp.dot(x, w1_ref[...], preferred_element_type=jnp.float32) + b1_ref[...]
    h1 = jnp.maximum(h1, 0.0)

    # fc2 + relu  (K = 1024, N = 256; zero-padded rows/cols are exact)
    h2 = jnp.dot(h1, w2_ref[...], preferred_element_type=jnp.float32) + b2_ref[...]
    h2 = jnp.maximum(h2, 0.0)

    # single fused head matmul (K = 256, N = 128): mean_rest | mean_depth | log_std
    heads = jnp.dot(h2, wh_ref[...], preferred_element_type=jnp.float32) + bh_ref[...]

    # relu only on the depth column via a precomputed lane mask (1, 128)
    out_ref[...] = jnp.where(mask_ref[...] != 0.0, jnp.maximum(heads, 0.0), heads)


def pack_params(params):
    """Pad + fuse the logical parameters into the kernel layout."""
    w1, b1, w2, b2, wm, bm, wd, bd, ws, bs = params
    out_size = ws.shape[1]
    assert 3 + out_size <= HEAD_PAD

    def pad2(a, rows, cols):
        return jnp.pad(a, ((0, rows - a.shape[0]), (0, cols - a.shape[1])))

    w1p = pad2(w1, w1.shape[0], H1_PAD)
    b1p = pad2(b1, 1, H1_PAD)
    w2p = pad2(w2, H1_PAD, H2_PAD)
    b2p = pad2(b2, 1, H2_PAD)

    wh = jnp.concatenate([wm, wd, ws], axis=1)   # (H2, 3 + out)
    bh = jnp.concatenate([bm, bd, bs], axis=1)   # (1, 3 + out)
    whp = pad2(wh, H2_PAD, HEAD_PAD)
    bhp = pad2(bh, 1, HEAD_PAD)

    # relu mask: 1.0 only on the depth column (index 2)
    mask = jnp.zeros((1, HEAD_PAD), jnp.float32).at[0, 2].set(1.0)
    return (w1p, b1p, w2p, b2p, whp, bhp, mask, out_size)


def my_model_forward(x, packed):
    """x: (B, input_size) f32. Returns (mean (B, 3), log_std (B, out_size))."""
    w1p, b1p, w2p, b2p, whp, bhp, mask, out_size = packed
    B, in_size = x.shape

    # batch tile: up to 512 rows for large batches (amortize per-step overhead),
    # otherwise the 8-rounded batch itself (single grid step).
    if B >= 512:
        TB = 512
    elif B >= 256:
        TB = 256
    else:
        TB = max(8, ((B + 7) // 8) * 8)
    Bp = pl.cdiv(B, TB) * TB
    if Bp != B:
        x = jnp.pad(x, ((0, Bp - B), (0, 0)))
    grid = (Bp // TB,)

    # weights stay VMEM-resident across batch tiles (index_map always block 0)
    def resident(a):
        return pl.BlockSpec(a.shape, lambda i: (0,) * a.ndim)

    out = pl.pallas_call(
        mlp_kernel,
        out_shape=jax.ShapeDtypeStruct((Bp, HEAD_PAD), jnp.float32),
        grid=grid,
        in_specs=[
            pl.BlockSpec((TB, in_size), lambda i: (i, 0)),
            resident(w1p), resident(b1p),
            resident(w2p), resident(b2p),
            resident(whp), resident(bhp),
            resident(mask),
        ],
        out_specs=pl.BlockSpec((TB, HEAD_PAD), lambda i: (i, 0)),
        compiler_params=pltpu.CompilerParams(
            dimension_semantics=("parallel",)),
    )(x, w1p, b1p, w2p, b2p, whp, bhp, mask)

    mean = out[:B, :3]
    log_std = out[:B, 3:3 + out_size]
    return mean, log_std


def init_params(key, input_size, output_size):
    """Deterministic synthetic parameters in the logical PyTorch shapes
    (weights already transposed to (in_features, out_features))."""
    ks = jax.random.split(key, 10)
    init = lambda k, shape, fan_in: (jax.random.normal(k, shape, jnp.float32)
                                     * (1.0 / np.sqrt(fan_in)))
    w1 = init(ks[0], (input_size, H1), input_size)
    b1 = init(ks[1], (1, H1), input_size)
    w2 = init(ks[2], (H1, H2), H1)
    b2 = init(ks[3], (1, H2), H1)
    wm = init(ks[4], (H2, 2), H2)            # fc3_mean
    bm = init(ks[5], (1, 2), H2)
    wd = init(ks[6], (H2, 1), H2)            # fc3_mean_depth
    bd = init(ks[7], (1, 1), H2)
    ws = init(ks[8], (H2, output_size), H2)  # fc3_log_std
    bs = init(ks[9], (1, output_size), H2)
    return (w1, b1, w2, b2, wm, bm, wd, bd, ws, bs)


def reference_forward(x, params):
    """Pure-JAX reference mirroring the PyTorch forward."""
    w1, b1, w2, b2, wm, bm, wd, bd, ws, bs = params
    h1 = jnp.maximum(x @ w1 + b1, 0.0)
    h2 = jnp.maximum(h1 @ w2 + b2, 0.0)
    mean_rest = h2 @ wm + bm
    mean_depth = jnp.maximum(h2 @ wd + bd, 0.0)
    log_std = h2 @ ws + bs
    mean = jnp.concatenate([mean_rest, mean_depth], axis=-1)
    return mean, log_std


if __name__ == "__main__":
    input_size = 32
    output_size = 3
    batch = 8

    key = jax.random.PRNGKey(0)
    kx, kp = jax.random.split(key)
    x = jax.random.normal(kx, (batch, input_size), jnp.float32)
    params = init_params(kp, input_size, output_size)
    packed = pack_params(params)

    mean, log_std = my_model_forward(x, packed)
    jax.block_until_ready((mean, log_std))

    mean_ref, log_std_ref = reference_forward(x, params)
    np.testing.assert_allclose(np.asarray(mean), np.asarray(mean_ref),
                               rtol=1e-4, atol=1e-4)
    np.testing.assert_allclose(np.asarray(log_std), np.asarray(log_std_ref),
                               rtol=1e-4, atol=1e-4)

    print("KERNEL_OK")
</pallas_src>

<mosaic_0001>
module attributes {stable_mosaic.version = 11 : i64} {
  func.func @mlp_kernel(%arg0: i32, %arg1: memref<8x32xf32, #tpu.memory_space<vmem>>, %arg2: memref<32x1024xf32, #tpu.memory_space<vmem>>, %arg3: memref<1x1024xf32, #tpu.memory_space<vmem>>, %arg4: memref<1024x256xf32, #tpu.memory_space<vmem>>, %arg5: memref<1x256xf32, #tpu.memory_space<vmem>>, %arg6: memref<256x128xf32, #tpu.memory_space<vmem>>, %arg7: memref<1x128xf32, #tpu.memory_space<vmem>>, %arg8: memref<1x128xf32, #tpu.memory_space<vmem>>, %arg9: memref<8x128xf32, #tpu.memory_space<vmem>>) attributes {dimension_semantics = [#tpu.dimension_semantics<parallel>], iteration_bounds = array<i64: 1>, scalar_prefetch = 0 : i64, scratch_operands = 0 : i64, tpu.core_type = #tpu.core_type<tc>, window_params = [{transform_indices = @transform_0, window_bounds = array<i64: 8, 32>}, {pipeline_mode = #tpu.pipeline_mode<synchronous>, transform_indices = @transform_1, window_bounds = array<i64: 32, 1024>}, {pipeline_mode = #tpu.pipeline_mode<synchronous>, transform_indices = @transform_2, window_bounds = array<i64: 1, 1024>}, {pipeline_mode = #tpu.pipeline_mode<synchronous>, transform_indices = @transform_3, window_bounds = array<i64: 1024, 256>}, {pipeline_mode = #tpu.pipeline_mode<synchronous>, transform_indices = @transform_4, window_bounds = array<i64: 1, 256>}, {pipeline_mode = #tpu.pipeline_mode<synchronous>, transform_indices = @transform_5, window_bounds = array<i64: 256, 128>}, {pipeline_mode = #tpu.pipeline_mode<synchronous>, transform_indices = @transform_6, window_bounds = array<i64: 1, 128>}, {pipeline_mode = #tpu.pipeline_mode<synchronous>, transform_indices = @transform_7, window_bounds = array<i64: 1, 128>}, {transform_indices = @transform_8, window_bounds = array<i64: 8, 128>}]} {
    %c0 = arith.constant 0 : index
    %c0_0 = arith.constant 0 : index
    %0 = vector.load %arg1[%c0, %c0_0] : memref<8x32xf32, #tpu.memory_space<vmem>>, vector<8x32xf32>
    %c0_1 = arith.constant 0 : index
    %c0_2 = arith.constant 0 : index
    %1 = vector.load %arg2[%c0_1, %c0_2] : memref<32x1024xf32, #tpu.memory_space<vmem>>, vector<32x1024xf32>
    %cst = arith.constant dense<0.000000e+00> : vector<8x1024xf32>
    %2 = tpu.matmul %0, %1, %cst {dimension_numbers = #tpu.dot_dimension_numbers<[1], [0], [0], [1], [0, 0, 1, 1], [], []>} : vector<8x32xf32>, vector<32x1024xf32>, vector<8x1024xf32> -> vector<8x1024xf32>
    %c0_3 = arith.constant 0 : index
    %c0_4 = arith.constant 0 : index
    %3 = vector.load %arg3[%c0_3, %c0_4] : memref<1x1024xf32, #tpu.memory_space<vmem>>, vector<1x1024xf32>
    %4 = vector.broadcast %3 : vector<1x1024xf32> to vector<8x1024xf32>
    %5 = arith.addf %2, %4 : vector<8x1024xf32>
    %cst_5 = arith.constant 0.000000e+00 : f32
    %6 = vector.broadcast %cst_5 : f32 to vector<8x1024xf32>
    %7 = arith.maximumf %5, %6 : vector<8x1024xf32>
    %c0_6 = arith.constant 0 : index
    %c0_7 = arith.constant 0 : index
    %8 = vector.load %arg4[%c0_6, %c0_7] : memref<1024x256xf32, #tpu.memory_space<vmem>>, vector<1024x256xf32>
    %cst_8 = arith.constant dense<0.000000e+00> : vector<8x256xf32>
    %9 = tpu.matmul %7, %8, %cst_8 {dimension_numbers = #tpu.dot_dimension_numbers<[1], [0], [0], [1], [0, 0, 1, 1], [], []>} : vector<8x1024xf32>, vector<1024x256xf32>, vector<8x256xf32> -> vector<8x256xf32>
    %c0_9 = arith.constant 0 : index
    %c0_10 = arith.constant 0 : index
    %10 = vector.load %arg5[%c0_9, %c0_10] : memref<1x256xf32, #tpu.memory_space<vmem>>, vector<1x256xf32>
    %11 = vector.broadcast %10 : vector<1x256xf32> to vector<8x256xf32>
    %12 = arith.addf %9, %11 : vector<8x256xf32>
    %cst_11 = arith.constant 0.000000e+00 : f32
    %13 = vector.broadcast %cst_11 : f32 to vector<8x256xf32>
    %14 = arith.maximumf %12, %13 : vector<8x256xf32>
    %c0_12 = arith.constant 0 : index
    %c0_13 = arith.constant 0 : index
    %15 = vector.load %arg6[%c0_12, %c0_13] : memref<256x128xf32, #tpu.memory_space<vmem>>, vector<256x128xf32>
    %cst_14 = arith.constant dense<0.000000e+00> : vector<8x128xf32>
    %16 = tpu.matmul %14, %15, %cst_14 {dimension_numbers = #tpu.dot_dimension_numbers<[1], [0], [0], [1], [0, 0, 1, 1], [], []>} : vector<8x256xf32>, vector<256x128xf32>, vector<8x128xf32> -> vector<8x128xf32>
    %c0_15 = arith.constant 0 : index
    %c0_16 = arith.constant 0 : index
    %17 = vector.load %arg7[%c0_15, %c0_16] : memref<1x128xf32, #tpu.memory_space<vmem>>, vector<1x128xf32>
    %18 = vector.broadcast %17 : vector<1x128xf32> to vector<8x128xf32>
    %19 = arith.addf %16, %18 : vector<8x128xf32>
    %c0_17 = arith.constant 0 : index
    %c0_18 = arith.constant 0 : index
    %20 = vector.load %arg8[%c0_17, %c0_18] : memref<1x128xf32, #tpu.memory_space<vmem>>, vector<1x128xf32>
    %cst_19 = arith.constant 0.000000e+00 : f32
    %21 = vector.broadcast %cst_19 : f32 to vector<1x128xf32>
    %22 = arith.cmpf one, %20, %21 : vector<1x128xf32>
    %cst_20 = arith.constant 0.000000e+00 : f32
    %23 = vector.broadcast %cst_20 : f32 to vector<8x128xf32>
    %24 = arith.maximumf %19, %23 : vector<8x128xf32>
    %25 = vector.shape_cast %22 : vector<1x128xi1> to vector<1x128xi1>
    %26 = vector.broadcast %25 : vector<1x128xi1> to vector<8x128xi1>
    %27 = arith.select %26, %24, %19 : vector<8x128xi1>, vector<8x128xf32>
    %c0_21 = arith.constant 0 : index
    %c0_22 = arith.constant 0 : index
    %28 = vector.load %arg9[%c0_21, %c0_22] : memref<8x128xf32, #tpu.memory_space<vmem>>, vector<8x128xf32>
    tpu.vector_store %arg9[%c0_21, %c0_22], %27 {strides = array<i32>} : memref<8x128xf32, #tpu.memory_space<vmem>>, vector<8x128xf32>,
    return
  }
  func.func @transform_0(%arg0: i32) -> (i32, i32) {
    %c0_i32 = arith.constant 0 : i32
    %c0_i32_0 = arith.constant 0 : i32
    return %arg0, %c0_i32 : i32, i32
  }
  func.func @transform_1(%arg0: i32) -> (i32, i32) {
    %c0_i32 = arith.constant 0 : i32
    %c0_i32_0 = arith.constant 0 : i32
    %c0_i32_1 = arith.constant 0 : i32
    return %c0_i32, %c0_i32_0 : i32, i32
  }
  func.func @transform_2(%arg0: i32) -> (i32, i32) {
    %c0_i32 = arith.constant 0 : i32
    %c0_i32_0 = arith.constant 0 : i32
    %c0_i32_1 = arith.constant 0 : i32
    return %c0_i32, %c0_i32_0 : i32, i32
  }
  func.func @transform_3(%arg0: i32) -> (i32, i32) {
    %c0_i32 = arith.constant 0 : i32
    %c0_i32_0 = arith.constant 0 : i32
    %c0_i32_1 = arith.constant 0 : i32
    return %c0_i32, %c0_i32_0 : i32, i32
  }
  func.func @transform_4(%arg0: i32) -> (i32, i32) {
    %c0_i32 = arith.constant 0 : i32
    %c0_i32_0 = arith.constant 0 : i32
    %c0_i32_1 = arith.constant 0 : i32
    return %c0_i32, %c0_i32_0 : i32, i32
  }
  func.func @transform_5(%arg0: i32) -> (i32, i32) {
    %c0_i32 = arith.constant 0 : i32
    %c0_i32_0 = arith.constant 0 : i32
    %c0_i32_1 = arith.constant 0 : i32
    return %c0_i32, %c0_i32_0 : i32, i32
  }
  func.func @transform_6(%arg0: i32) -> (i32, i32) {
    %c0_i32 = arith.constant 0 : i32
    %c0_i32_0 = arith.constant 0 : i32
    %c0_i32_1 = arith.constant 0 : i32
    return %c0_i32, %c0_i32_0 : i32, i32
  }
  func.func @transform_7(%arg0: i32) -> (i32, i32) {
    %c0_i32 = arith.constant 0 : i32
    %c0_i32_0 = arith.constant 0 : i32
    %c0_i32_1 = arith.constant 0 : i32
    return %c0_i32, %c0_i32_0 : i32, i32
  }
  func.func @transform_8(%arg0: i32) -> (i32, i32) {
    %c0_i32 = arith.constant 0 : i32
    %c0_i32_0 = arith.constant 0 : i32
    return %arg0, %c0_i32 : i32, i32
  }
}

</mosaic_0001>

<llo_original>
// kernel: tpu_custom_call.1
$region0: #{tpu_custom_call.1}
  #allocation0 [shape = 'u32[]', space=smem, size = 0x4, offset = 0x4, fixed_abs, tag = 'smem constant byte address 0x4 - core index']
  #allocation1 [shape = 'u32[144,128]{1,0:T(1,128)}', space=vmem, size = 0x12000, scoped, tag = 'internal scratch']
  %s0 = inlined_call_operand.hbm [shape: f32[8,32], index: 0, kind: input, shape index: {}]
  %s1 = inlined_call_operand.hbm [shape: f32[32,1024], index: 1, kind: input, shape index: {}]
  %s2 = inlined_call_operand.hbm [shape: f32[1,1024], index: 2, kind: input, shape index: {}]
  %s3 = inlined_call_operand.hbm [shape: f32[1024,256], index: 3, kind: input, shape index: {}]
  %s4 = inlined_call_operand.vmem [shape: f32[1,256], index: 4, kind: input, shape index: {}]
  %s5 = inlined_call_operand.hbm [shape: f32[256,128], index: 5, kind: input, shape index: {}]
  %s6 = inlined_call_operand.vmem [shape: f32[1,128], index: 6, kind: input, shape index: {}]
  %s7 = inlined_call_operand.vmem [shape: f32[1,128], index: 7, kind: input, shape index: {}]
  %s8 = inlined_call_operand.hbm [shape: f32[8,128], index: 8, kind: output, shape index: {}]
  %s9 = sld [smem:[#allocation0]]
  $region62: #{tpu_custom_call.1} parent=0
    _
  %s11 = ssub.s32 1, %s9
  %s12 = scalar_select 0, %s11, %s9
  $region1: #{tpu_custom_call.1} parent=0
    #allocation2 [shape = 'u8[4096]{0}', space=vmem, size = 0x1000, scoped, tag = 'input window, operand 0, single buffered']
    #allocation3 [shape = 's32[1]{0}', space=sflag, size = 0x4, scoped, tag = 'scoped memory for tpu_custom_call.1']
    #allocation4 [shape = 's32[1]{0}', space=sflag, size = 0x4, scoped, tag = 'scoped memory for tpu_custom_call.1']
    #allocation5 [shape = 'u8[131072]{0}', space=vmem, size = 0x20000, scoped, tag = 'input window, operand 1, single buffered']
    #allocation6 [shape = 's32[1]{0}', space=sflag, size = 0x4, scoped, tag = 'scoped memory for tpu_custom_call.1']
    #allocation7 [shape = 'u8[4096]{0}', space=vmem, size = 0x1000, scoped, tag = 'input window, operand 2, single buffered']
    #allocation8 [shape = 'u8[1048576]{0}', space=vmem, size = 0x100000, scoped, tag = 'input window, operand 3, single buffered']
    #allocation9 [shape = 's32[1]{0}', space=sflag, size = 0x4, scoped, tag = 'scoped memory for tpu_custom_call.1']
    #allocation10 [shape = 'u8[131072]{0}', space=vmem, size = 0x20000, scoped, tag = 'input window, operand 5, single buffered']
    #allocation11 [shape = 'u8[4096]{0}', space=vmem, size = 0x1000, scoped, tag = 'output window, operand 0, single buffered']
    %13 = vsyncpa [#allocation3], 0
    %14 = vsyncpa [#allocation6], 0
    %15 = vsyncpa [#allocation9], 0
    %16 = vsyncpa [#allocation4], 0
    // Predicated region
    $region2: #{tpu_custom_call.1} parent=1 // pred_check
      _
    $region3: #{tpu_custom_call.1} parent=1 // pred_check_branch
      %18 = sbr.rel (0) target = $region5
    $region4: #{tpu_custom_call.1} parent=1 // pred_region
      %s20 = ssub.s32 128, 128
      %21 = vsyncadd [#allocation3], %s20
      %s23 = sshll.u32 [#allocation2], 4
      %s24 = int_to_ptr.vmem [resolvable:$true] %s23
      %26 = dma.hbm_to_vmem [thread:$0]  %s0, 128, %s24, [#allocation3]
    $region5: #{tpu_custom_call.1} parent=1 // pred_fallthru
      _
    // Predicated region
    $region6: #{tpu_custom_call.1} parent=1 // pred_check
      _
    $region7: #{tpu_custom_call.1} parent=1 // pred_check_branch
      %28 = sbr.rel (0) target = $region9
    $region8: #{tpu_custom_call.1} parent=1 // pred_region
      %s30 = ssub.s32 4096, 4096
      %31 = vsyncadd [#allocation6], %s30
      %s32 = sshll.u32 [#allocation5], 4
      %s33 = int_to_ptr.vmem [resolvable:$true] %s32
      %38 = dma.hbm_to_vmem [thread:$0]  %s1, 4096, %s33, [#allocation6], 1024, 1024, 64
    $region9: #{tpu_custom_call.1} parent=1 // pred_fallthru
      _
    // Predicated region
    $region10: #{tpu_custom_call.1} parent=1 // pred_check
      _
    $region11: #{tpu_custom_call.1} parent=1 // pred_check_branch
      %40 = sbr.rel (0) target = $region13
    $region12: #{tpu_custom_call.1} parent=1 // pred_region
      %s42 = ssub.s32 128, 128
      %43 = vsyncadd [#allocation6], %s42
      %s45 = sshll.u32 [#allocation7], 4
      %s46 = int_to_ptr.vmem [resolvable:$true] %s45
      %48 = dma.hbm_to_vmem [thread:$0]  %s2, 128, %s46, [#allocation6]
    $region13: #{tpu_custom_call.1} parent=1 // pred_fallthru
      _
    // Predicated region
    $region14: #{tpu_custom_call.1} parent=1 // pred_check
      _
    $region15: #{tpu_custom_call.1} parent=1 // pred_check_branch
      %50 = sbr.rel (0) target = $region17
    $region16: #{tpu_custom_call.1} parent=1 // pred_region
      %s52 = ssub.s32 32768, 32768
      %53 = vsyncadd [#allocation9], %s52
      %s54 = sshll.u32 [#allocation8], 4
      %s55 = int_to_ptr.vmem [resolvable:$true] %s54
      %60 = dma.hbm_to_vmem [thread:$0]  %s3, 32768, %s55, [#allocation9], 256, 256, 16
    $region17: #{tpu_custom_call.1} parent=1 // pred_fallthru
      _
    // Predicated region
    $region18: #{tpu_custom_call.1} parent=1 // pred_check
      _
    $region19: #{tpu_custom_call.1} parent=1 // pred_check_branch
      %62 = sbr.rel (0) target = $region21
    $region20: #{tpu_custom_call.1} parent=1 // pred_region
      _
    $region21: #{tpu_custom_call.1} parent=1 // pred_fallthru
      _
    // Predicated region
    $region22: #{tpu_custom_call.1} parent=1 // pred_check
      _
    $region23: #{tpu_custom_call.1} parent=1 // pred_check_branch
      %64 = sbr.rel (0) target = $region25
    $region24: #{tpu_custom_call.1} parent=1 // pred_region
      %s66 = ssub.s32 4096, 4096
      %67 = vsyncadd [#allocation9], %s66
      %s68 = sshll.u32 [#allocation10], 4
      %s69 = int_to_ptr.vmem [resolvable:$true] %s68
      %74 = dma.hbm_to_vmem [thread:$0]  %s5, 4096, %s69, [#allocation9], 128, 128, 8
    $region25: #{tpu_custom_call.1} parent=1 // pred_fallthru
      _
    // Predicated region
    $region26: #{tpu_custom_call.1} parent=1 // pred_check
      _
    $region27: #{tpu_custom_call.1} parent=1 // pred_check_branch
      %76 = sbr.rel (0) target = $region29
    $region28: #{tpu_custom_call.1} parent=1 // pred_region
      _
    $region29: #{tpu_custom_call.1} parent=1 // pred_fallthru
      _
    // Predicated region
    $region30: #{tpu_custom_call.1} parent=1 // pred_check
      _
    $region31: #{tpu_custom_call.1} parent=1 // pred_check_branch
      %78 = sbr.rel (0) target = $region33
    $region32: #{tpu_custom_call.1} parent=1 // pred_region
      _
    $region33: #{tpu_custom_call.1} parent=1 // pred_fallthru
      _
    // Predicated region
    $region34: #{tpu_custom_call.1} parent=1 // pred_check
      _
    $region35: #{tpu_custom_call.1} parent=1 // pred_check_branch
      %80 = sbr.rel (0) target = $region37
    $region36: #{tpu_custom_call.1} parent=1 // pred_region
      %81 = dma.done [#allocation3], 128
    $region37: #{tpu_custom_call.1} parent=1 // pred_fallthru
      _
    // Predicated region
    $region38: #{tpu_custom_call.1} parent=1 // pred_check
      _
    $region39: #{tpu_custom_call.1} parent=1 // pred_check_branch
      %83 = sbr.rel (0) target = $region41
    $region40: #{tpu_custom_call.1} parent=1 // pred_region
      %84 = dma.done [#allocation6], 4096
    $region41: #{tpu_custom_call.1} parent=1 // pred_fallthru
      _
    // Predicated region
    $region42: #{tpu_custom_call.1} parent=1 // pred_check
      _
    $region43: #{tpu_custom_call.1} parent=1 // pred_check_branch
      %86 = sbr.rel (0) target = $region45
    $region44: #{tpu_custom_call.1} parent=1 // pred_region
      %87 = dma.done [#allocation6], 128
    $region45: #{tpu_custom_call.1} parent=1 // pred_fallthru
      _
    // Predicated region
    $region46: #{tpu_custom_call.1} parent=1 // pred_check
      _
    $region47: #{tpu_custom_call.1} parent=1 // pred_check_branch
      %89 = sbr.rel (0) target = $region49
    $region48: #{tpu_custom_call.1} parent=1 // pred_region
      %90 = dma.done [#allocation9], 32768
    $region49: #{tpu_custom_call.1} parent=1 // pred_fallthru
      _
    // Predicated region
    $region50: #{tpu_custom_call.1} parent=1 // pred_check
      _
    $region51: #{tpu_custom_call.1} parent=1 // pred_check_branch
      %92 = sbr.rel (0) target = $region53
    $region52: #{tpu_custom_call.1} parent=1 // pred_region
      %93 = dma.done [#allocation9], 4096
    $region53: #{tpu_custom_call.1} parent=1 // pred_fallthru
      _
    %v94 = vld [vmem:[#allocation2] sm:$0xff]
    %v95 = vld [vmem:[#allocation5] sm:$0xff]
    %v96 = vld [vmem:[#allocation5 + $0x8] sm:$0xff]
    %v97 = vld [vmem:[#allocation5 + $0x10] sm:$0xff]
    %v98 = vld [vmem:[#allocation5 + $0x18] sm:$0xff]
    %v99 = vld [vmem:[#allocation5 + $0x20] sm:$0xff]
    %v100 = vld [vmem:[#allocation5 + $0x28] sm:$0xff]
    %v101 = vld [vmem:[#allocation5 + $0x30] sm:$0xff]
    %v102 = vld [vmem:[#allocation5 + $0x38] sm:$0xff]
    %v103 = vld [vmem:[#allocation5 + $0x40] sm:$0xff]
    %v104 = vld [vmem:[#allocation5 + $0x48] sm:$0xff]
    %v105 = vld [vmem:[#allocation5 + $0x50] sm:$0xff]
    %v106 = vld [vmem:[#allocation5 + $0x58] sm:$0xff]
    %v107 = vld [vmem:[#allocation5 + $0x60] sm:$0xff]
    %v108 = vld [vmem:[#allocation5 + $0x68] sm:$0xff]
    %v109 = vld [vmem:[#allocation5 + $0x70] sm:$0xff]
    %v110 = vld [vmem:[#allocation5 + $0x78] sm:$0xff]
    %v111 = vld [vmem:[#allocation5 + $0x80] sm:$0xff]
    %v112 = vld [vmem:[#allocation5 + $0x88] sm:$0xff]
    %v113 = vld [vmem:[#allocation5 + $0x90] sm:$0xff]
    %v114 = vld [vmem:[#allocation5 + $0x98] sm:$0xff]
    %v115 = vld [vmem:[#allocation5 + $0xa0] sm:$0xff]
    %v116 = vld [vmem:[#allocation5 + $0xa8] sm:$0xff]
    %v117 = vld [vmem:[#allocation5 + $0xb0] sm:$0xff]
    %v118 = vld [vmem:[#allocation5 + $0xb8] sm:$0xff]
    %v119 = vld [vmem:[#allocation5 + $0xc0] sm:$0xff]
    %v120 = vld [vmem:[#allocation5 + $0xc8] sm:$0xff]
    %v121 = vld [vmem:[#allocation5 + $0xd0] sm:$0xff]
    %v122 = vld [vmem:[#allocation5 + $0xd8] sm:$0xff]
    %v123 = vld [vmem:[#allocation5 + $0xe0] sm:$0xff]
    %v124 = vld [vmem:[#allocation5 + $0xe8] sm:$0xff]
    %v125 = vld [vmem:[#allocation5 + $0xf0] sm:$0xff]
    %v126 = vld [vmem:[#allocation5 + $0xf8] sm:$0xff]
    %v127 = vld [vmem:[#allocation7] sm:$0xff]
    %v129 = vlaneseq
    %v130 = vshrl.u32 %v129, 7
    %v131 = vsub.s32 0, %v130
    %v132 = vrot.slane %v127, %v131
    %v133 = vlaneseq
    %v134 = vshrl.u32 %v133, 7
    %v135 = vsub.s32 1, %v134
    %v136 = vrot.slane %v127, %v135
    %v137 = vlaneseq
    %v138 = vshrl.u32 %v137, 7
    %v139 = vsub.s32 2, %v138
    %v140 = vrot.slane %v127, %v139
    %v141 = vlaneseq
    %v142 = vshrl.u32 %v141, 7
    %v143 = vsub.s32 3, %v142
    %v144 = vrot.slane %v127, %v143
    %v145 = vlaneseq
    %v146 = vshrl.u32 %v145, 7
    %v147 = vsub.s32 4, %v146
    %v148 = vrot.slane %v127, %v147
    %v149 = vlaneseq
    %v150 = vshrl.u32 %v149, 7
    %v151 = vsub.s32 5, %v150
    %v152 = vrot.slane %v127, %v151
    %v153 = vlaneseq
    %v154 = vshrl.u32 %v153, 7
    %v155 = vsub.s32 6, %v154
    %v156 = vrot.slane %v127, %v155
    %v157 = vlaneseq
    %v158 = vshrl.u32 %v157, 7
    %v159 = vsub.s32 7, %v158
    %v160 = vrot.slane %v127, %v159
    %vm169 = vcmask 261120
    %v171 = vsel %vm169, %v94, 0
    %173 = vmatprep.subr.mxu0 %v96
    %174 = vmatpush1.msra.mxu0 %v95
    %175 = vmatprep.subr.mxu0 %v104
    %176 = vmatpush1.msra.mxu0 %v103
    %177 = vmatprep.subr.mxu0 %v112
    %178 = vmatpush1.msra.mxu0 %v111
    %179 = vmatprep.subr.mxu0 %v120
    %180 = vmatpush1.msra.mxu0 %v119
    %181 = vmatprep.subr.mxu0 0.0
    %182 = vmatpush1.msra.mxu0 0.0
    %183 = vmatprep.subr.mxu0 0.0
    %184 = vmatpush1.msra.mxu0 0.0
    %185 = vmatprep.subr.mxu0 0.0
    %186 = vmatpush1.msra.mxu0 0.0
    %187 = vmatprep.subr.mxu0 0.0
    %188 = vmatpush1.msra.mxu0 0.0
    %189 = vmatprep.subr.mxu0 0.0
    %190 = vmatpush1.msra.mxu0 0.0
    %191 = vmatprep.subr.mxu0 0.0
    %192 = vmatpush1.msra.mxu0 0.0
    %193 = vmatprep.subr.mxu0 0.0
    %194 = vmatpush1.msra.mxu0 0.0
    %195 = vmatprep.subr.mxu0 0.0
    %196 = vmatpush1.msra.mxu0 0.0
    %197 = vmatprep.subr.mxu0 0.0
    %198 = vmatpush1.msra.mxu0 0.0
    %199 = vmatprep.subr.mxu0 0.0
    %200 = vmatpush1.msra.mxu0 0.0
    %201 = vmatprep.subr.mxu0 0.0
    %202 = vmatpush1.msra.mxu0 0.0
    %203 = vmatprep.subr.mxu0 0.0
    %204 = vmatpush1.msra.mxu0 0.0
    %205 = vmatprep.subr.mxu0 0.0
    %206 = vmatpush1.msra.mxu0 0.0
    %207 = vmatprep.subr.mxu0 0.0
    %208 = vmatpush1.msra.mxu0 0.0
    %209 = vmatprep.subr.mxu0 0.0
    %210 = vmatpush1.msra.mxu0 0.0
    %211 = vmatprep.subr.mxu0 0.0
    %212 = vmatpush1.msra.mxu0 0.0
    %213 = vmatprep.subr.mxu0 0.0
    %214 = vmatpush1.msra.mxu0 0.0
    %215 = vmatprep.subr.mxu0 0.0
    %216 = vmatpush1.msra.mxu0 0.0
    %217 = vmatprep.subr.mxu0 0.0
    %218 = vmatpush1.msra.mxu0 0.0
    %219 = vmatprep.subr.mxu0 0.0
    %220 = vmatpush1.msra.mxu0 0.0
    %221 = vmatprep.subr.mxu0 0.0
    %222 = vmatpush1.msra.mxu0 0.0
    %223 = vmatprep.subr.mxu0 0.0
    %224 = vmatpush1.msra.mxu0 0.0
    %225 = vmatprep.subr.mxu0 0.0
    %226 = vmatpush1.msra.mxu0 0.0
    %227 = vmatprep.subr.mxu0 0.0
    %228 = vmatpush1.msra.mxu0 0.0
    %229 = vmatprep.subr.mxu0 0.0
    %230 = vmatpush1.msra.mxu0 0.0
    %231 = vmatprep.subr.mxu0 0.0
    %232 = vmatpush1.msra.mxu0 0.0
    %233 = vmatprep.subr.mxu0 0.0
    %234 = vmatpush1.msra.mxu0 0.0
    %235 = vmatprep.subr.mxu0 0.0
    %236 = vmatpush1.msra.mxu0 0.0
    %237 = vmatprep.mubr.f32.mxu0 0.0
    %238 = vmatmul.mubr.f32.gmra.mrb[0].mxu0 %v171
    %v239 = vpop.f32.mrb[0].mxu0
    %v240 = vadd.f32 %v132, %v239
    %v241 = vpop.f32.mrb[0].mxu0
    %v242 = vadd.f32 %v136, %v241
    %243 = vdwg.mxu0
    %244 = vmatprep.subr.mxu0 %v98
    %245 = vmatpush1.msra.mxu0 %v97
    %246 = vmatprep.subr.mxu0 %v106
    %247 = vmatpush1.msra.mxu0 %v105
    %248 = vmatprep.subr.mxu0 %v114
    %249 = vmatpush1.msra.mxu0 %v113
    %250 = vmatprep.subr.mxu0 %v122
    %251 = vmatpush1.msra.mxu0 %v121
    %252 = vmatprep.subr.mxu0 0.0
    %253 = vmatpush1.msra.mxu0 0.0
    %254 = vmatprep.subr.mxu0 0.0
    %255 = vmatpush1.msra.mxu0 0.0
    %256 = vmatprep.subr.mxu0 0.0
    %257 = vmatpush1.msra.mxu0 0.0
    %258 = vmatprep.subr.mxu0 0.0
    %259 = vmatpush1.msra.mxu0 0.0
    %260 = vmatprep.subr.mxu0 0.0
    %261 = vmatpush1.msra.mxu0 0.0
    %262 = vmatprep.subr.mxu0 0.0
    %263 = vmatpush1.msra.mxu0 0.0
    %264 = vmatprep.subr.mxu0 0.0
    %265 = vmatpush1.msra.mxu0 0.0
    %266 = vmatprep.subr.mxu0 0.0
    %267 = vmatpush1.msra.mxu0 0.0
    %268 = vmatprep.subr.mxu0 0.0
    %269 = vmatpush1.msra.mxu0 0.0
    %270 = vmatprep.subr.mxu0 0.0
    %271 = vmatpush1.msra.mxu0 0.0
    %272 = vmatprep.subr.mxu0 0.0
    %273 = vmatpush1.msra.mxu0 0.0
    %274 = vmatprep.subr.mxu0 0.0
    %275 = vmatpush1.msra.mxu0 0.0
    %276 = vmatprep.subr.mxu0 0.0
    %277 = vmatpush1.msra.mxu0 0.0
    %278 = vmatprep.subr.mxu0 0.0
    %279 = vmatpush1.msra.mxu0 0.0
    %280 = vmatprep.subr.mxu0 0.0
    %281 = vmatpush1.msra.mxu0 0.0
    %282 = vmatprep.subr.mxu0 0.0
    %283 = vmatpush1.msra.mxu0 0.0
    %284 = vmatprep.subr.mxu0 0.0
    %285 = vmatpush1.msra.mxu0 0.0
    %286 = vmatprep.subr.mxu0 0.0
    %287 = vmatpush1.msra.mxu0 0.0
    %288 = vmatprep.subr.mxu0 0.0
    %289 = vmatpush1.msra.mxu0 0.0
    %290 = vmatprep.subr.mxu0 0.0
    %291 = vmatpush1.msra.mxu0 0.0
    %292 = vmatprep.subr.mxu0 0.0
    %293 = vmatpush1.msra.mxu0 0.0
    %294 = vmatprep.subr.mxu0 0.0
    %295 = vmatpush1.msra.mxu0 0.0
    %296 = vmatprep.subr.mxu0 0.0
    %297 = vmatpush1.msra.mxu0 0.0
    %298 = vmatprep.subr.mxu0 0.0
    %299 = vmatpush1.msra.mxu0 0.0
    %300 = vmatprep.subr.mxu0 0.0
    %301 = vmatpush1.msra.mxu0 0.0
    %302 = vmatprep.subr.mxu0 0.0
    %303 = vmatpush1.msra.mxu0 0.0
    %304 = vmatprep.subr.mxu0 0.0
    %305 = vmatpush1.msra.mxu0 0.0
    %306 = vmatprep.subr.mxu0 0.0
    %307 = vmatpush1.msra.mxu0 0.0
    %308 = vmatprep.mubr.f32.mxu0 0.0
    %309 = vmatmul.mubr.f32.gmra.mrb[0].mxu0 %v171
    %v310 = vpop.f32.mrb[0].mxu0
    %v311 = vadd.f32 %v140, %v310
    %v312 = vpop.f32.mrb[0].mxu0
    %v313 = vadd.f32 %v144, %v312
    %314 = vdwg.mxu0
    %315 = vmatprep.subr.mxu0 %v100
    %316 = vmatpush1.msra.mxu0 %v99
    %317 = vmatprep.subr.mxu0 %v108
    %318 = vmatpush1.msra.mxu0 %v107
    %319 = vmatprep.subr.mxu0 %v116
    %320 = vmatpush1.msra.mxu0 %v115
    %321 = vmatprep.subr.mxu0 %v124
    %322 = vmatpush1.msra.mxu0 %v123
    %323 = vmatprep.subr.mxu0 0.0
    %324 = vmatpush1.msra.mxu0 0.0
    %325 = vmatprep.subr.mxu0 0.0
    %326 = vmatpush1.msra.mxu0 0.0
    %327 = vmatprep.subr.mxu0 0.0
    %328 = vmatpush1.msra.mxu0 0.0
    %329 = vmatprep.subr.mxu0 0.0
    %330 = vmatpush1.msra.mxu0 0.0
    %331 = vmatprep.subr.mxu0 0.0
    %332 = vmatpush1.msra.mxu0 0.0
    %333 = vmatprep.subr.mxu0 0.0
    %334 = vmatpush1.msra.mxu0 0.0
    %335 = vmatprep.subr.mxu0 0.0
    %336 = vmatpush1.msra.mxu0 0.0
    %337 = vmatprep.subr.mxu0 0.0
    %338 = vmatpush1.msra.mxu0 0.0
    %339 = vmatprep.subr.mxu0 0.0
    %340 = vmatpush1.msra.mxu0 0.0
    %341 = vmatprep.subr.mxu0 0.0
    %342 = vmatpush1.msra.mxu0 0.0
    %343 = vmatprep.subr.mxu0 0.0
    %344 = vmatpush1.msra.mxu0 0.0
    %345 = vmatprep.subr.mxu0 0.0
    %346 = vmatpush1.msra.mxu0 0.0
    %347 = vmatprep.subr.mxu0 0.0
    %348 = vmatpush1.msra.mxu0 0.0
    %349 = vmatprep.subr.mxu0 0.0
    %350 = vmatpush1.msra.mxu0 0.0
    %351 = vmatprep.subr.mxu0 0.0
    %352 = vmatpush1.msra.mxu0 0.0
    %353 = vmatprep.subr.mxu0 0.0
    %354 = vmatpush1.msra.mxu0 0.0
    %355 = vmatprep.subr.mxu0 0.0
    %356 = vmatpush1.msra.mxu0 0.0
    %357 = vmatprep.subr.mxu0 0.0
    %358 = vmatpush1.msra.mxu0 0.0
    %359 = vmatprep.subr.mxu0 0.0
    %360 = vmatpush1.msra.mxu0 0.0
    %361 = vmatprep.subr.mxu0 0.0
    %362 = vmatpush1.msra.mxu0 0.0
    %363 = vmatprep.subr.mxu0 0.0
    %364 = vmatpush1.msra.mxu0 0.0
    %365 = vmatprep.subr.mxu0 0.0
    %366 = vmatpush1.msra.mxu0 0.0
    %367 = vmatprep.subr.mxu0 0.0
    %368 = vmatpush1.msra.mxu0 0.0
    %369 = vmatprep.subr.mxu0 0.0
    %370 = vmatpush1.msra.mxu0 0.0
    %371 = vmatprep.subr.mxu0 0.0
    %372 = vmatpush1.msra.mxu0 0.0
    %373 = vmatprep.subr.mxu0 0.0
    %374 = vmatpush1.msra.mxu0 0.0
    %375 = vmatprep.subr.mxu0 0.0
    %376 = vmatpush1.msra.mxu0 0.0
    %377 = vmatprep.subr.mxu0 0.0
    %378 = vmatpush1.msra.mxu0 0.0
    %379 = vmatprep.mubr.f32.mxu0 0.0
    %380 = vmatmul.mubr.f32.gmra.mrb[0].mxu0 %v171
    %v381 = vpop.f32.mrb[0].mxu0
    %v382 = vadd.f32 %v148, %v381
    %v383 = vpop.f32.mrb[0].mxu0
    %v384 = vadd.f32 %v152, %v383
    %385 = vdwg.mxu0
    %386 = vmatprep.subr.mxu0 %v102
    %387 = vmatpush1.msra.mxu0 %v101
    %388 = vmatprep.subr.mxu0 %v110
    %389 = vmatpush1.msra.mxu0 %v109
    %390 = vmatprep.subr.mxu0 %v118
    %391 = vmatpush1.msra.mxu0 %v117
    %392 = vmatprep.subr.mxu0 %v126
    %393 = vmatpush1.msra.mxu0 %v125
    %394 = vmatprep.subr.mxu0 0.0
    %395 = vmatpush1.msra.mxu0 0.0
    %396 = vmatprep.subr.mxu0 0.0
    %397 = vmatpush1.msra.mxu0 0.0
    %398 = vmatprep.subr.mxu0 0.0
    %399 = vmatpush1.msra.mxu0 0.0
    %400 = vmatprep.subr.mxu0 0.0
    %401 = vmatpush1.msra.mxu0 0.0
    %402 = vmatprep.subr.mxu0 0.0
    %403 = vmatpush1.msra.mxu0 0.0
    %404 = vmatprep.subr.mxu0 0.0
    %405 = vmatpush1.msra.mxu0 0.0
    %406 = vmatprep.subr.mxu0 0.0
    %407 = vmatpush1.msra.mxu0 0.0
    %408 = vmatprep.subr.mxu0 0.0
    %409 = vmatpush1.msra.mxu0 0.0
    %410 = vmatprep.subr.mxu0 0.0
    %411 = vmatpush1.msra.mxu0 0.0
    %412 = vmatprep.subr.mxu0 0.0
    %413 = vmatpush1.msra.mxu0 0.0
    %414 = vmatprep.subr.mxu0 0.0
    %415 = vmatpush1.msra.mxu0 0.0
    %416 = vmatprep.subr.mxu0 0.0
    %417 = vmatpush1.msra.mxu0 0.0
    %418 = vmatprep.subr.mxu0 0.0
    %419 = vmatpush1.msra.mxu0 0.0
    %420 = vmatprep.subr.mxu0 0.0
    %421 = vmatpush1.msra.mxu0 0.0
    %422 = vmatprep.subr.mxu0 0.0
    %423 = vmatpush1.msra.mxu0 0.0
    %424 = vmatprep.subr.mxu0 0.0
    %425 = vmatpush1.msra.mxu0 0.0
    %426 = vmatprep.subr.mxu0 0.0
    %427 = vmatpush1.msra.mxu0 0.0
    %428 = vmatprep.subr.mxu0 0.0
    %429 = vmatpush1.msra.mxu0 0.0
    %430 = vmatprep.subr.mxu0 0.0
    %431 = vmatpush1.msra.mxu0 0.0
    %432 = vmatprep.subr.mxu0 0.0
    %433 = vmatpush1.msra.mxu0 0.0
    %434 = vmatprep.subr.mxu0 0.0
    %435 = vmatpush1.msra.mxu0 0.0
    %436 = vmatprep.subr.mxu0 0.0
    %437 = vmatpush1.msra.mxu0 0.0
    %438 = vmatprep.subr.mxu0 0.0
    %439 = vmatpush1.msra.mxu0 0.0
    %440 = vmatprep.subr.mxu0 0.0
    %441 = vmatpush1.msra.mxu0 0.0
    %442 = vmatprep.subr.mxu0 0.0
    %443 = vmatpush1.msra.mxu0 0.0
    %444 = vmatprep.subr.mxu0 0.0
    %445 = vmatpush1.msra.mxu0 0.0
    %446 = vmatprep.subr.mxu0 0.0
    %447 = vmatpush1.msra.mxu0 0.0
    %448 = vmatprep.subr.mxu0 0.0
    %449 = vmatpush1.msra.mxu0 0.0
    %450 = vmatprep.mubr.f32.mxu0 0.0
    %451 = vmatmul.mubr.f32.gmra.mrb[0].mxu0 %v171
    %v452 = vpop.f32.mrb[0].mxu0
    %v453 = vadd.f32 %v156, %v452
    %v454 = vpop.f32.mrb[0].mxu0
    %v455 = vadd.f32 %v160, %v454
    %456 = vdwg.mxu0
    %v457 = vmax.f32 %v240, 0.0
    %v458 = vmax.f32 %v242, 0.0
    %v459 = vmax.f32 %v311, 0.0
    %v460 = vmax.f32 %v313, 0.0
    %v461 = vmax.f32 %v382, 0.0
    %v462 = vmax.f32 %v384, 0.0
    %v463 = vmax.f32 %v453, 0.0
    %v464 = vmax.f32 %v455, 0.0
    %v465 = vld [vmem:[#allocation8] sm:$0xff]
    %v466 = vld [vmem:[#allocation8 + $0x8] sm:$0xff]
    %v467 = vld [vmem:[#allocation8 + $0x10] sm:$0xff]
    %v468 = vld [vmem:[#allocation8 + $0x18] sm:$0xff]
    %v469 = vld [vmem:[#allocation8 + $0x20] sm:$0xff]
    %v470 = vld [vmem:[#allocation8 + $0x28] sm:$0xff]
    %v471 = vld [vmem:[#allocation8 + $0x30] sm:$0xff]
    %v472 = vld [vmem:[#allocation8 + $0x38] sm:$0xff]
    %v473 = vld [vmem:[#allocation8 + $0x40] sm:$0xff]
    %v474 = vld [vmem:[#allocation8 + $0x48] sm:$0xff]
    %v475 = vld [vmem:[#allocation8 + $0x50] sm:$0xff]
    %v476 = vld [vmem:[#allocation8 + $0x58] sm:$0xff]
    %v477 = vld [vmem:[#allocation8 + $0x60] sm:$0xff]
    %v478 = vld [vmem:[#allocation8 + $0x68] sm:$0xff]
    %v479 = vld [vmem:[#allocation8 + $0x70] sm:$0xff]
    %v480 = vld [vmem:[#allocation8 + $0x78] sm:$0xff]
    %v481 = vld [vmem:[#allocation8 + $0x80] sm:$0xff]
    %v482 = vld [vmem:[#allocation8 + $0x88] sm:$0xff]
    %v483 = vld [vmem:[#allocation8 + $0x90] sm:$0xff]
    %v484 = vld [vmem:[#allocation8 + $0x98] sm:$0xff]
    %v485 = vld [vmem:[#allocation8 + $0xa0] sm:$0xff]
    %v486 = vld [vmem:[#allocation8 + $0xa8] sm:$0xff]
    %v487 = vld [vmem:[#allocation8 + $0xb0] sm:$0xff]
    %v488 = vld [vmem:[#allocation8 + $0xb8] sm:$0xff]
    %v489 = vld [vmem:[#allocation8 + $0xc0] sm:$0xff]
    %v490 = vld [vmem:[#allocation8 + $0xc8] sm:$0xff]
    %v491 = vld [vmem:[#allocation8 + $0xd0] sm:$0xff]
    %v492 = vld [vmem:[#allocation8 + $0xd8] sm:$0xff]
    %v493 = vld [vmem:[#allocation8 + $0xe0] sm:$0xff]
    %v494 = vld [vmem:[#allocation8 + $0xe8] sm:$0xff]
    %v495 = vld [vmem:[#allocation8 + $0xf0] sm:$0xff]
    %v496 = vld [vmem:[#allocation8 + $0xf8] sm:$0xff]
    %v497 = vld [vmem:[#allocation8 + $0x100] sm:$0xff]
    %v498 = vld [vmem:[#allocation8 + $0x108] sm:$0xff]
    %v499 = vld [vmem:[#allocation8 + $0x110] sm:$0xff]
    %v500 = vld [vmem:[#allocation8 + $0x118] sm:$0xff]
    %v501 = vld [vmem:[#allocation8 + $0x120] sm:$0xff]
    %v502 = vld [vmem:[#allocation8 + $0x128] sm:$0xff]
    %v503 = vld [vmem:[#allocation8 + $0x130] sm:$0xff]
    %v504 = vld [vmem:[#allocation8 + $0x138] sm:$0xff]
    %v505 = vld [vmem:[#allocation8 + $0x140] sm:$0xff]
    %v506 = vld [vmem:[#allocation8 + $0x148] sm:$0xff]
    %v507 = vld [vmem:[#allocation8 + $0x150] sm:$0xff]
    %v508 = vld [vmem:[#allocation8 + $0x158] sm:$0xff]
    %v509 = vld [vmem:[#allocation8 + $0x160] sm:$0xff]
    %v510 = vld [vmem:[#allocation8 + $0x168] sm:$0xff]
    %v511 = vld [vmem:[#allocation8 + $0x170] sm:$0xff]
    %v512 = vld [vmem:[#allocation8 + $0x178] sm:$0xff]
    %v513 = vld [vmem:[#allocation8 + $0x180] sm:$0xff]
    %v514 = vld [vmem:[#allocation8 + $0x188] sm:$0xff]
    %v515 = vld [vmem:[#allocation8 + $0x190] sm:$0xff]
    %v516 = vld [vmem:[#allocation8 + $0x198] sm:$0xff]
    %v517 = vld [vmem:[#allocation8 + $0x1a0] sm:$0xff]
    %v518 = vld [vmem:[#allocation8 + $0x1a8] sm:$0xff]
    %v519 = vld [vmem:[#allocation8 + $0x1b0] sm:$0xff]
    %v520 = vld [vmem:[#allocation8 + $0x1b8] sm:$0xff]
    %v521 = vld [vmem:[#allocation8 + $0x1c0] sm:$0xff]
    %v522 = vld [vmem:[#allocation8 + $0x1c8] sm:$0xff]
    %v523 = vld [vmem:[#allocation8 + $0x1d0] sm:$0xff]
    %v524 = vld [vmem:[#allocation8 + $0x1d8] sm:$0xff]
    %v525 = vld [vmem:[#allocation8 + $0x1e0] sm:$0xff]
    %v526 = vld [vmem:[#allocation8 + $0x1e8] sm:$0xff]
    %v527 = vld [vmem:[#allocation8 + $0x1f0] sm:$0xff]
    %v528 = vld [vmem:[#allocation8 + $0x1f8] sm:$0xff]
    %v529 = vld [vmem:[#allocation8 + $0x200] sm:$0xff]
    %v530 = vld [vmem:[#allocation8 + $0x208] sm:$0xff]
    %v531 = vld [vmem:[#allocation8 + $0x210] sm:$0xff]
    %v532 = vld [vmem:[#allocation8 + $0x218] sm:$0xff]
    %v533 = vld [vmem:[#allocation8 + $0x220] sm:$0xff]
    %v534 = vld [vmem:[#allocation8 + $0x228] sm:$0xff]
    %v535 = vld [vmem:[#allocation8 + $0x230] sm:$0xff]
    %v536 = vld [vmem:[#allocation8 + $0x238] sm:$0xff]
    %v537 = vld [vmem:[#allocation8 + $0x240] sm:$0xff]
    %v538 = vld [vmem:[#allocation8 + $0x248] sm:$0xff]
    %v539 = vld [vmem:[#allocation8 + $0x250] sm:$0xff]
    %v540 = vld [vmem:[#allocation8 + $0x258] sm:$0xff]
    %v541 = vld [vmem:[#allocation8 + $0x260] sm:$0xff]
    %v542 = vld [vmem:[#allocation8 + $0x268] sm:$0xff]
    %v543 = vld [vmem:[#allocation8 + $0x270] sm:$0xff]
    %v544 = vld [vmem:[#allocation8 + $0x278] sm:$0xff]
    %v545 = vld [vmem:[#allocation8 + $0x280] sm:$0xff]
    %v546 = vld [vmem:[#allocation8 + $0x288] sm:$0xff]
    %v547 = vld [vmem:[#allocation8 + $0x290] sm:$0xff]
    %v548 = vld [vmem:[#allocation8 + $0x298] sm:$0xff]
    %v549 = vld [vmem:[#allocation8 + $0x2a0] sm:$0xff]
    %v550 = vld [vmem:[#allocation8 + $0x2a8] sm:$0xff]
    %v551 = vld [vmem:[#allocation8 + $0x2b0] sm:$0xff]
    %v552 = vld [vmem:[#allocation8 + $0x2b8] sm:$0xff]
    %v553 = vld [vmem:[#allocation8 + $0x2c0] sm:$0xff]
    %v554 = vld [vmem:[#allocation8 + $0x2c8] sm:$0xff]
    %v555 = vld [vmem:[#allocation8 + $0x2d0] sm:$0xff]
    %v556 = vld [vmem:[#allocation8 + $0x2d8] sm:$0xff]
    %v557 = vld [vmem:[#allocation8 + $0x2e0] sm:$0xff]
    %v558 = vld [vmem:[#allocation8 + $0x2e8] sm:$0xff]
    %v559 = vld [vmem:[#allocation8 + $0x2f0] sm:$0xff]
    %v560 = vld [vmem:[#allocation8 + $0x2f8] sm:$0xff]
    %v561 = vld [vmem:[#allocation8 + $0x300] sm:$0xff]
    %v562 = vld [vmem:[#allocation8 + $0x308] sm:$0xff]
    %v563 = vld [vmem:[#allocation8 + $0x310] sm:$0xff]
    %v564 = vld [vmem:[#allocation8 + $0x318] sm:$0xff]
    %v565 = vld [vmem:[#allocation8 + $0x320] sm:$0xff]
    %v566 = vld [vmem:[#allocation8 + $0x328] sm:$0xff]
    %v567 = vld [vmem:[#allocation8 + $0x330] sm:$0xff]
    %v568 = vld [vmem:[#allocation8 + $0x338] sm:$0xff]
    %v569 = vld [vmem:[#allocation8 + $0x340] sm:$0xff]
    %v570 = vld [vmem:[#allocation8 + $0x348] sm:$0xff]
    %v571 = vld [vmem:[#allocation8 + $0x350] sm:$0xff]
    %v572 = vld [vmem:[#allocation8 + $0x358] sm:$0xff]
    %v573 = vld [vmem:[#allocation8 + $0x360] sm:$0xff]
    %v574 = vld [vmem:[#allocation8 + $0x368] sm:$0xff]
    %v575 = vld [vmem:[#allocation8 + $0x370] sm:$0xff]
    %v576 = vld [vmem:[#allocation8 + $0x378] sm:$0xff]
    %v577 = vld [vmem:[#allocation8 + $0x380] sm:$0xff]
    %v578 = vld [vmem:[#allocation8 + $0x388] sm:$0xff]
    %v579 = vld [vmem:[#allocation8 + $0x390] sm:$0xff]
    %v580 = vld [vmem:[#allocation8 + $0x398] sm:$0xff]
    %v581 = vld [vmem:[#allocation8 + $0x3a0] sm:$0xff]
    %v582 = vld [vmem:[#allocation8 + $0x3a8] sm:$0xff]
    %v583 = vld [vmem:[#allocation8 + $0x3b0] sm:$0xff]
    %v584 = vld [vmem:[#allocation8 + $0x3b8] sm:$0xff]
    %v585 = vld [vmem:[#allocation8 + $0x3c0] sm:$0xff]
    %v586 = vld [vmem:[#allocation8 + $0x3c8] sm:$0xff]
    %v587 = vld [vmem:[#allocation8 + $0x3d0] sm:$0xff]
    %v588 = vld [vmem:[#allocation8 + $0x3d8] sm:$0xff]
    %v589 = vld [vmem:[#allocation8 + $0x3e0] sm:$0xff]
    %v590 = vld [vmem:[#allocation8 + $0x3e8] sm:$0xff]
    %v591 = vld [vmem:[#allocation8 + $0x3f0] sm:$0xff]
    %v592 = vld [vmem:[#allocation8 + $0x3f8] sm:$0xff]
    %v593 = vld [vmem:[#allocation8 + $0x400] sm:$0xff]
    %v594 = vld [vmem:[#allocation8 + $0x408] sm:$0xff]
    %v595 = vld [vmem:[#allocation8 + $0x410] sm:$0xff]
    %v596 = vld [vmem:[#allocation8 + $0x418] sm:$0xff]
    %v597 = vld [vmem:[#allocation8 + $0x420] sm:$0xff]
    %v598 = vld [vmem:[#allocation8 + $0x428] sm:$0xff]
    %v599 = vld [vmem:[#allocation8 + $0x430] sm:$0xff]
    %v600 = vld [vmem:[#allocation8 + $0x438] sm:$0xff]
    %v601 = vld [vmem:[#allocation8 + $0x440] sm:$0xff]
    %v602 = vld [vmem:[#allocation8 + $0x448] sm:$0xff]
    %v603 = vld [vmem:[#allocation8 + $0x450] sm:$0xff]
    %v604 = vld [vmem:[#allocation8 + $0x458] sm:$0xff]
    %v605 = vld [vmem:[#allocation8 + $0x460] sm:$0xff]
    %v606 = vld [vmem:[#allocation8 + $0x468] sm:$0xff]
    %v607 = vld [vmem:[#allocation8 + $0x470] sm:$0xff]
    %v608 = vld [vmem:[#allocation8 + $0x478] sm:$0xff]
    %v609 = vld [vmem:[#allocation8 + $0x480] sm:$0xff]
    %v610 = vld [vmem:[#allocation8 + $0x488] sm:$0xff]
    %v611 = vld [vmem:[#allocation8 + $0x490] sm:$0xff]
    %v612 = vld [vmem:[#allocation8 + $0x498] sm:$0xff]
    %v613 = vld [vmem:[#allocation8 + $0x4a0] sm:$0xff]
    %v614 = vld [vmem:[#allocation8 + $0x4a8] sm:$0xff]
    %v615 = vld [vmem:[#allocation8 + $0x4b0] sm:$0xff]
    %v616 = vld [vmem:[#allocation8 + $0x4b8] sm:$0xff]
    %v617 = vld [vmem:[#allocation8 + $0x4c0] sm:$0xff]
    %v618 = vld [vmem:[#allocation8 + $0x4c8] sm:$0xff]
    %v619 = vld [vmem:[#allocation8 + $0x4d0] sm:$0xff]
    %v620 = vld [vmem:[#allocation8 + $0x4d8] sm:$0xff]
    %v621 = vld [vmem:[#allocation8 + $0x4e0] sm:$0xff]
    %v622 = vld [vmem:[#allocation8 + $0x4e8] sm:$0xff]
    %v623 = vld [vmem:[#allocation8 + $0x4f0] sm:$0xff]
    %v624 = vld [vmem:[#allocation8 + $0x4f8] sm:$0xff]
    %v625 = vld [vmem:[#allocation8 + $0x500] sm:$0xff]
    %v626 = vld [vmem:[#allocation8 + $0x508] sm:$0xff]
    %v627 = vld [vmem:[#allocation8 + $0x510] sm:$0xff]
    %v628 = vld [vmem:[#allocation8 + $0x518] sm:$0xff]
    %v629 = vld [vmem:[#allocation8 + $0x520] sm:$0xff]
    %v630 = vld [vmem:[#allocation8 + $0x528] sm:$0xff]
    %v631 = vld [vmem:[#allocation8 + $0x530] sm:$0xff]
    %v632 = vld [vmem:[#allocation8 + $0x538] sm:$0xff]
    %v633 = vld [vmem:[#allocation8 + $0x540] sm:$0xff]
    %v634 = vld [vmem:[#allocation8 + $0x548] sm:$0xff]
    %v635 = vld [vmem:[#allocation8 + $0x550] sm:$0xff]
    %v636 = vld [vmem:[#allocation8 + $0x558] sm:$0xff]
    %v637 = vld [vmem:[#allocation8 + $0x560] sm:$0xff]
    %v638 = vld [vmem:[#allocation8 + $0x568] sm:$0xff]
    %v639 = vld [vmem:[#allocation8 + $0x570] sm:$0xff]
    %v640 = vld [vmem:[#allocation8 + $0x578] sm:$0xff]
    %v641 = vld [vmem:[#allocation8 + $0x580] sm:$0xff]
    %v642 = vld [vmem:[#allocation8 + $0x588] sm:$0xff]
    %v643 = vld [vmem:[#allocation8 + $0x590] sm:$0xff]
    %v644 = vld [vmem:[#allocation8 + $0x598] sm:$0xff]
    %v645 = vld [vmem:[#allocation8 + $0x5a0] sm:$0xff]
    %v646 = vld [vmem:[#allocation8 + $0x5a8] sm:$0xff]
    %v647 = vld [vmem:[#allocation8 + $0x5b0] sm:$0xff]
    %v648 = vld [vmem:[#allocation8 + $0x5b8] sm:$0xff]
    %v649 = vld [vmem:[#allocation8 + $0x5c0] sm:$0xff]
    %v650 = vld [vmem:[#allocation8 + $0x5c8] sm:$0xff]
    %v651 = vld [vmem:[#allocation8 + $0x5d0] sm:$0xff]
    %v652 = vld [vmem:[#allocation8 + $0x5d8] sm:$0xff]
    %v653 = vld [vmem:[#allocation8 + $0x5e0] sm:$0xff]
    %v654 = vld [vmem:[#allocation8 + $0x5e8] sm:$0xff]
    %v655 = vld [vmem:[#allocation8 + $0x5f0] sm:$0xff]
    %v656 = vld [vmem:[#allocation8 + $0x5f8] sm:$0xff]
    %v657 = vld [vmem:[#allocation8 + $0x600] sm:$0xff]
    %v658 = vld [vmem:[#allocation8 + $0x608] sm:$0xff]
    %v659 = vld [vmem:[#allocation8 + $0x610] sm:$0xff]
    %v660 = vld [vmem:[#allocation8 + $0x618] sm:$0xff]
    %v661 = vld [vmem:[#allocation8 + $0x620] sm:$0xff]
    %v662 = vld [vmem:[#allocation8 + $0x628] sm:$0xff]
    %v663 = vld [vmem:[#allocation8 + $0x630] sm:$0xff]
    %v664 = vld [vmem:[#allocation8 + $0x638] sm:$0xff]
    %v665 = vld [vmem:[#allocation8 + $0x640] sm:$0xff]
    %v666 = vld [vmem:[#allocation8 + $0x648] sm:$0xff]
    %v667 = vld [vmem:[#allocation8 + $0x650] sm:$0xff]
    %v668 = vld [vmem:[#allocation8 + $0x658] sm:$0xff]
    %v669 = vld [vmem:[#allocation8 + $0x660] sm:$0xff]
    %v670 = vld [vmem:[#allocation8 + $0x668] sm:$0xff]
    %v671 = vld [vmem:[#allocation8 + $0x670] sm:$0xff]
    %v672 = vld [vmem:[#allocation8 + $0x678] sm:$0xff]
    %v673 = vld [vmem:[#allocation8 + $0x680] sm:$0xff]
    %v674 = vld [vmem:[#allocation8 + $0x688] sm:$0xff]
    %v675 = vld [vmem:[#allocation8 + $0x690] sm:$0xff]
    %v676 = vld [vmem:[#allocation8 + $0x698] sm:$0xff]
    %v677 = vld [vmem:[#allocation8 + $0x6a0] sm:$0xff]
    %v678 = vld [vmem:[#allocation8 + $0x6a8] sm:$0xff]
    %v679 = vld [vmem:[#allocation8 + $0x6b0] sm:$0xff]
    %v680 = vld [vmem:[#allocation8 + $0x6b8] sm:$0xff]
    %v681 = vld [vmem:[#allocation8 + $0x6c0] sm:$0xff]
    %v682 = vld [vmem:[#allocation8 + $0x6c8] sm:$0xff]
    %v683 = vld [vmem:[#allocation8 + $0x6d0] sm:$0xff]
    %v684 = vld [vmem:[#allocation8 + $0x6d8] sm:$0xff]
    %v685 = vld [vmem:[#allocation8 + $0x6e0] sm:$0xff]
    %v686 = vld [vmem:[#allocation8 + $0x6e8] sm:$0xff]
    %v687 = vld [vmem:[#allocation8 + $0x6f0] sm:$0xff]
    %v688 = vld [vmem:[#allocation8 + $0x6f8] sm:$0xff]
    %v689 = vld [vmem:[#allocation8 + $0x700] sm:$0xff]
    %v690 = vld [vmem:[#allocation8 + $0x708] sm:$0xff]
    %v691 = vld [vmem:[#allocation8 + $0x710] sm:$0xff]
    %v692 = vld [vmem:[#allocation8 + $0x718] sm:$0xff]
    %v693 = vld [vmem:[#allocation8 + $0x720] sm:$0xff]
    %v694 = vld [vmem:[#allocation8 + $0x728] sm:$0xff]
    %v695 = vld [vmem:[#allocation8 + $0x730] sm:$0xff]
    %v696 = vld [vmem:[#allocation8 + $0x738] sm:$0xff]
    %v697 = vld [vmem:[#allocation8 + $0x740] sm:$0xff]
    %v698 = vld [vmem:[#allocation8 + $0x748] sm:$0xff]
    %v699 = vld [vmem:[#allocation8 + $0x750] sm:$0xff]
    %v700 = vld [vmem:[#allocation8 + $0x758] sm:$0xff]
    %v701 = vld [vmem:[#allocation8 + $0x760] sm:$0xff]
    %v702 = vld [vmem:[#allocation8 + $0x768] sm:$0xff]
    %v703 = vld [vmem:[#allocation8 + $0x770] sm:$0xff]
    %v704 = vld [vmem:[#allocation8 + $0x778] sm:$0xff]
    %v705 = vld [vmem:[#allocation8 + $0x780] sm:$0xff]
    %v706 = vld [vmem:[#allocation8 + $0x788] sm:$0xff]
    %v707 = vld [vmem:[#allocation8 + $0x790] sm:$0xff]
    %v708 = vld [vmem:[#allocation8 + $0x798] sm:$0xff]
    %v709 = vld [vmem:[#allocation8 + $0x7a0] sm:$0xff]
    %v710 = vld [vmem:[#allocation8 + $0x7a8] sm:$0xff]
    %v711 = vld [vmem:[#allocation8 + $0x7b0] sm:$0xff]
    %v712 = vld [vmem:[#allocation8 + $0x7b8] sm:$0xff]
    %v713 = vld [vmem:[#allocation8 + $0x7c0] sm:$0xff]
    %v714 = vld [vmem:[#allocation8 + $0x7c8] sm:$0xff]
    %v715 = vld [vmem:[#allocation8 + $0x7d0] sm:$0xff]
    %v716 = vld [vmem:[#allocation8 + $0x7d8] sm:$0xff]
    %v717 = vld [vmem:[#allocation8 + $0x7e0] sm:$0xff]
    %v718 = vld [vmem:[#allocation8 + $0x7e8] sm:$0xff]
    %v719 = vld [vmem:[#allocation8 + $0x7f0] sm:$0xff]
    %v720 = vld [vmem:[#allocation8 + $0x7f8] sm:$0xff]
    %v721 = vld [vmem:[%s4] sm:$0x3]
    %v723 = vlaneseq
    %v724 = vshrl.u32 %v723, 7
    %v725 = vsub.s32 0, %v724
    %v726 = vrot.slane %v721, %v725
    %v727 = vlaneseq
    %v728 = vshrl.u32 %v727, 7
    %v729 = vsub.s32 1, %v728
    %v730 = vrot.slane %v721, %v729
    %733 = vmatprep.subr.mxu0 %v466
    %734 = vmatpush1.msra.mxu0 %v465
    %735 = vmatprep.subr.mxu0 %v468
    %736 = vmatpush1.msra.mxu0 %v467
    %737 = vmatprep.subr.mxu0 %v470
    %738 = vmatpush1.msra.mxu0 %v469
    %739 = vmatprep.subr.mxu0 %v472
    %740 = vmatpush1.msra.mxu0 %v471
    %741 = vmatprep.subr.mxu0 %v474
    %742 = vmatpush1.msra.mxu0 %v473
    %743 = vmatprep.subr.mxu0 %v476
    %744 = vmatpush1.msra.mxu0 %v475
    %745 = vmatprep.subr.mxu0 %v478
    %746 = vmatpush1.msra.mxu0 %v477
    %747 = vmatprep.subr.mxu0 %v480
    %748 = vmatpush1.msra.mxu0 %v479
    %749 = vmatprep.subr.mxu0 %v482
    %750 = vmatpush1.msra.mxu0 %v481
    %751 = vmatprep.subr.mxu0 %v484
    %752 = vmatpush1.msra.mxu0 %v483
    %753 = vmatprep.subr.mxu0 %v486
    %754 = vmatpush1.msra.mxu0 %v485
    %755 = vmatprep.subr.mxu0 %v488
    %756 = vmatpush1.msra.mxu0 %v487
    %757 = vmatprep.subr.mxu0 %v490
    %758 = vmatpush1.msra.mxu0 %v489
    %759 = vmatprep.subr.mxu0 %v492
    %760 = vmatpush1.msra.mxu0 %v491
    %761 = vmatprep.subr.mxu0 %v494
    %762 = vmatpush1.msra.mxu0 %v493
    %763 = vmatprep.subr.mxu0 %v496
    %764 = vmatpush1.msra.mxu0 %v495
    %765 = vmatprep.subr.mxu0 %v498
    %766 = vmatpush1.msra.mxu0 %v497
    %767 = vmatprep.subr.mxu0 %v500
    %768 = vmatpush1.msra.mxu0 %v499
    %769 = vmatprep.subr.mxu0 %v502
    %770 = vmatpush1.msra.mxu0 %v501
    %771 = vmatprep.subr.mxu0 %v504
    %772 = vmatpush1.msra.mxu0 %v503
    %773 = vmatprep.subr.mxu0 %v506
    %774 = vmatpush1.msra.mxu0 %v505
    %775 = vmatprep.subr.mxu0 %v508
    %776 = vmatpush1.msra.mxu0 %v507
    %777 = vmatprep.subr.mxu0 %v510
    %778 = vmatpush1.msra.mxu0 %v509
    %779 = vmatprep.subr.mxu0 %v512
    %780 = vmatpush1.msra.mxu0 %v511
    %781 = vmatprep.subr.mxu0 %v514
    %782 = vmatpush1.msra.mxu0 %v513
    %783 = vmatprep.subr.mxu0 %v516
    %784 = vmatpush1.msra.mxu0 %v515
    %785 = vmatprep.subr.mxu0 %v518
    %786 = vmatpush1.msra.mxu0 %v517
    %787 = vmatprep.subr.mxu0 %v520
    %788 = vmatpush1.msra.mxu0 %v519
    %789 = vmatprep.subr.mxu0 %v522
    %790 = vmatpush1.msra.mxu0 %v521
    %791 = vmatprep.subr.mxu0 %v524
    %792 = vmatpush1.msra.mxu0 %v523
    %793 = vmatprep.subr.mxu0 %v526
    %794 = vmatpush1.msra.mxu0 %v525
    %795 = vmatprep.subr.mxu0 %v528
    %796 = vmatpush1.msra.mxu0 %v527
    %797 = vmatprep.mubr.f32.mxu0 %v458
    %798 = vmatmul.mubr.f32.gmra.mrb[0].mxu0 %v457
    %v799 = vpop.f32.mrb[0].mxu0
    %v800 = vadd.f32 %v726, %v799
    %v801 = vpop.f32.mrb[0].mxu0
    %v802 = vadd.f32 %v730, %v801
    %803 = vdwg.mxu0
    %804 = vmatprep.subr.mxu0 %v530
    %805 = vmatpush1.msra.mxu0 %v529
    %806 = vmatprep.subr.mxu0 %v532
    %807 = vmatpush1.msra.mxu0 %v531
    %808 = vmatprep.subr.mxu0 %v534
    %809 = vmatpush1.msra.mxu0 %v533
    %810 = vmatprep.subr.mxu0 %v536
    %811 = vmatpush1.msra.mxu0 %v535
    %812 = vmatprep.subr.mxu0 %v538
    %813 = vmatpush1.msra.mxu0 %v537
    %814 = vmatprep.subr.mxu0 %v540
    %815 = vmatpush1.msra.mxu0 %v539
    %816 = vmatprep.subr.mxu0 %v542
    %817 = vmatpush1.msra.mxu0 %v541
    %818 = vmatprep.subr.mxu0 %v544
    %819 = vmatpush1.msra.mxu0 %v543
    %820 = vmatprep.subr.mxu0 %v546
    %821 = vmatpush1.msra.mxu0 %v545
    %822 = vmatprep.subr.mxu0 %v548
    %823 = vmatpush1.msra.mxu0 %v547
    %824 = vmatprep.subr.mxu0 %v550
    %825 = vmatpush1.msra.mxu0 %v549
    %826 = vmatprep.subr.mxu0 %v552
    %827 = vmatpush1.msra.mxu0 %v551
    %828 = vmatprep.subr.mxu0 %v554
    %829 = vmatpush1.msra.mxu0 %v553
    %830 = vmatprep.subr.mxu0 %v556
    %831 = vmatpush1.msra.mxu0 %v555
    %832 = vmatprep.subr.mxu0 %v558
    %833 = vmatpush1.msra.mxu0 %v557
    %834 = vmatprep.subr.mxu0 %v560
    %835 = vmatpush1.msra.mxu0 %v559
    %836 = vmatprep.subr.mxu0 %v562
    %837 = vmatpush1.msra.mxu0 %v561
    %838 = vmatprep.subr.mxu0 %v564
    %839 = vmatpush1.msra.mxu0 %v563
    %840 = vmatprep.subr.mxu0 %v566
    %841 = vmatpush1.msra.mxu0 %v565
    %842 = vmatprep.subr.mxu0 %v568
    %843 = vmatpush1.msra.mxu0 %v567
    %844 = vmatprep.subr.mxu0 %v570
    %845 = vmatpush1.msra.mxu0 %v569
    %846 = vmatprep.subr.mxu0 %v572
    %847 = vmatpush1.msra.mxu0 %v571
    %848 = vmatprep.subr.mxu0 %v574
    %849 = vmatpush1.msra.mxu0 %v573
    %850 = vmatprep.subr.mxu0 %v576
    %851 = vmatpush1.msra.mxu0 %v575
    %852 = vmatprep.subr.mxu0 %v578
    %853 = vmatpush1.msra.mxu0 %v577
    %854 = vmatprep.subr.mxu0 %v580
    %855 = vmatpush1.msra.mxu0 %v579
    %856 = vmatprep.subr.mxu0 %v582
    %857 = vmatpush1.msra.mxu0 %v581
    %858 = vmatprep.subr.mxu0 %v584
    %859 = vmatpush1.msra.mxu0 %v583
    %860 = vmatprep.subr.mxu0 %v586
    %861 = vmatpush1.msra.mxu0 %v585
    %862 = vmatprep.subr.mxu0 %v588
    %863 = vmatpush1.msra.mxu0 %v587
    %864 = vmatprep.subr.mxu0 %v590
    %865 = vmatpush1.msra.mxu0 %v589
    %866 = vmatprep.subr.mxu0 %v592
    %867 = vmatpush1.msra.mxu0 %v591
    %868 = vmatprep.mubr.f32.mxu0 %v460
    %869 = vmatmul.mubr.f32.gmra.mrb[0].mxu0 %v459
    %v870 = vpop.f32.mrb[0].mxu0
    %v871 = vadd.f32 %v800, %v870
    %v872 = vpop.f32.mrb[0].mxu0
    %v873 = vadd.f32 %v802, %v872
    %874 = vdwg.mxu0
    %875 = vmatprep.subr.mxu0 %v594
    %876 = vmatpush1.msra.mxu0 %v593
    %877 = vmatprep.subr.mxu0 %v596
    %878 = vmatpush1.msra.mxu0 %v595
    %879 = vmatprep.subr.mxu0 %v598
    %880 = vmatpush1.msra.mxu0 %v597
    %881 = vmatprep.subr.mxu0 %v600
    %882 = vmatpush1.msra.mxu0 %v599
    %883 = vmatprep.subr.mxu0 %v602
    %884 = vmatpush1.msra.mxu0 %v601
    %885 = vmatprep.subr.mxu0 %v604
    %886 = vmatpush1.msra.mxu0 %v603
    %887 = vmatprep.subr.mxu0 %v606
    %888 = vmatpush1.msra.mxu0 %v605
    %889 = vmatprep.subr.mxu0 %v608
    %890 = vmatpush1.msra.mxu0 %v607
    %891 = vmatprep.subr.mxu0 %v610
    %892 = vmatpush1.msra.mxu0 %v609
    %893 = vmatprep.subr.mxu0 %v612
    %894 = vmatpush1.msra.mxu0 %v611
    %895 = vmatprep.subr.mxu0 %v614
    %896 = vmatpush1.msra.mxu0 %v613
    %897 = vmatprep.subr.mxu0 %v616
    %898 = vmatpush1.msra.mxu0 %v615
    %899 = vmatprep.subr.mxu0 %v618
    %900 = vmatpush1.msra.mxu0 %v617
    %901 = vmatprep.subr.mxu0 %v620
    %902 = vmatpush1.msra.mxu0 %v619
    %903 = vmatprep.subr.mxu0 %v622
    %904 = vmatpush1.msra.mxu0 %v621
    %905 = vmatprep.subr.mxu0 %v624
    %906 = vmatpush1.msra.mxu0 %v623
    %907 = vmatprep.subr.mxu0 %v626
    %908 = vmatpush1.msra.mxu0 %v625
    %909 = vmatprep.subr.mxu0 %v628
    %910 = vmatpush1.msra.mxu0 %v627
    %911 = vmatprep.subr.mxu0 %v630
    %912 = vmatpush1.msra.mxu0 %v629
    %913 = vmatprep.subr.mxu0 %v632
    %914 = vmatpush1.msra.mxu0 %v631
    %915 = vmatprep.subr.mxu0 %v634
    %916 = vmatpush1.msra.mxu0 %v633
    %917 = vmatprep.subr.mxu0 %v636
    %918 = vmatpush1.msra.mxu0 %v635
    %919 = vmatprep.subr.mxu0 %v638
    %920 = vmatpush1.msra.mxu0 %v637
    %921 = vmatprep.subr.mxu0 %v640
    %922 = vmatpush1.msra.mxu0 %v639
    %923 = vmatprep.subr.mxu0 %v642
    %924 = vmatpush1.msra.mxu0 %v641
    %925 = vmatprep.subr.mxu0 %v644
    %926 = vmatpush1.msra.mxu0 %v643
    %927 = vmatprep.subr.mxu0 %v646
    %928 = vmatpush1.msra.mxu0 %v645
    %929 = vmatprep.subr.mxu0 %v648
    %930 = vmatpush1.msra.mxu0 %v647
    %931 = vmatprep.subr.mxu0 %v650
    %932 = vmatpush1.msra.mxu0 %v649
    %933 = vmatprep.subr.mxu0 %v652
    %934 = vmatpush1.msra.mxu0 %v651
    %935 = vmatprep.subr.mxu0 %v654
    %936 = vmatpush1.msra.mxu0 %v653
    %937 = vmatprep.subr.mxu0 %v656
    %938 = vmatpush1.msra.mxu0 %v655
    %939 = vmatprep.mubr.f32.mxu0 %v462
    %940 = vmatmul.mubr.f32.gmra.mrb[0].mxu0 %v461
    %v941 = vpop.f32.mrb[0].mxu0
    %v942 = vadd.f32 %v871, %v941
    %v943 = vpop.f32.mrb[0].mxu0
    %v944 = vadd.f32 %v873, %v943
    %945 = vdwg.mxu0
    %946 = vmatprep.subr.mxu0 %v658
    %947 = vmatpush1.msra.mxu0 %v657
    %948 = vmatprep.subr.mxu0 %v660
    %949 = vmatpush1.msra.mxu0 %v659
    %950 = vmatprep.subr.mxu0 %v662
    %951 = vmatpush1.msra.mxu0 %v661
    %952 = vmatprep.subr.mxu0 %v664
    %953 = vmatpush1.msra.mxu0 %v663
    %954 = vmatprep.subr.mxu0 %v666
    %955 = vmatpush1.msra.mxu0 %v665
    %956 = vmatprep.subr.mxu0 %v668
    %957 = vmatpush1.msra.mxu0 %v667
    %958 = vmatprep.subr.mxu0 %v670
    %959 = vmatpush1.msra.mxu0 %v669
    %960 = vmatprep.subr.mxu0 %v672
    %961 = vmatpush1.msra.mxu0 %v671
    %962 = vmatprep.subr.mxu0 %v674
    %963 = vmatpush1.msra.mxu0 %v673
    %964 = vmatprep.subr.mxu0 %v676
    %965 = vmatpush1.msra.mxu0 %v675
    %966 = vmatprep.subr.mxu0 %v678
    %967 = vmatpush1.msra.mxu0 %v677
    %968 = vmatprep.subr.mxu0 %v680
    %969 = vmatpush1.msra.mxu0 %v679
    %970 = vmatprep.subr.mxu0 %v682
    %971 = vmatpush1.msra.mxu0 %v681
    %972 = vmatprep.subr.mxu0 %v684
    %973 = vmatpush1.msra.mxu0 %v683
    %974 = vmatprep.subr.mxu0 %v686
    %975 = vmatpush1.msra.mxu0 %v685
    %976 = vmatprep.subr.mxu0 %v688
    %977 = vmatpush1.msra.mxu0 %v687
    %978 = vmatprep.subr.mxu0 %v690
    %979 = vmatpush1.msra.mxu0 %v689
    %980 = vmatprep.subr.mxu0 %v692
    %981 = vmatpush1.msra.mxu0 %v691
    %982 = vmatprep.subr.mxu0 %v694
    %983 = vmatpush1.msra.mxu0 %v693
    %984 = vmatprep.subr.mxu0 %v696
    %985 = vmatpush1.msra.mxu0 %v695
    %986 = vmatprep.subr.mxu0 %v698
    %987 = vmatpush1.msra.mxu0 %v697
    %988 = vmatprep.subr.mxu0 %v700
    %989 = vmatpush1.msra.mxu0 %v699
    %990 = vmatprep.subr.mxu0 %v702
    %991 = vmatpush1.msra.mxu0 %v701
    %992 = vmatprep.subr.mxu0 %v704
    %993 = vmatpush1.msra.mxu0 %v703
    %994 = vmatprep.subr.mxu0 %v706
    %995 = vmatpush1.msra.mxu0 %v705
    %996 = vmatprep.subr.mxu0 %v708
    %997 = vmatpush1.msra.mxu0 %v707
    %998 = vmatprep.subr.mxu0 %v710
    %999 = vmatpush1.msra.mxu0 %v709
    %1000 = vmatprep.subr.mxu0 %v712
    %1001 = vmatpush1.msra.mxu0 %v711
    %1002 = vmatprep.subr.mxu0 %v714
    %1003 = vmatpush1.msra.mxu0 %v713
    %1004 = vmatprep.subr.mxu0 %v716
    %1005 = vmatpush1.msra.mxu0 %v715
    %1006 = vmatprep.subr.mxu0 %v718
    %1007 = vmatpush1.msra.mxu0 %v717
    %1008 = vmatprep.subr.mxu0 %v720
    %1009 = vmatpush1.msra.mxu0 %v719
    %1010 = vmatprep.mubr.f32.mxu0 %v464
    %1011 = vmatmul.mubr.f32.gmra.mrb[0].mxu0 %v463
    %v1012 = vpop.f32.mrb[0].mxu0
    %v1013 = vadd.f32 %v942, %v1012
    %v1014 = vpop.f32.mrb[0].mxu0
    %v1015 = vadd.f32 %v944, %v1014
    %1016 = vdwg.mxu0
    %v1017 = vmax.f32 %v1013, 0.0
    %v1018 = vmax.f32 %v1015, 0.0
    %v1019 = vld [vmem:[#allocation10] sm:$0xff]
    %v1020 = vld [vmem:[#allocation10 + $0x8] sm:$0xff]
    %v1021 = vld [vmem:[#allocation10 + $0x10] sm:$0xff]
    %v1022 = vld [vmem:[#allocation10 + $0x18] sm:$0xff]
    %v1023 = vld [vmem:[#allocation10 + $0x20] sm:$0xff]
    %v1024 = vld [vmem:[#allocation10 + $0x28] sm:$0xff]
    %v1025 = vld [vmem:[#allocation10 + $0x30] sm:$0xff]
    %v1026 = vld [vmem:[#allocation10 + $0x38] sm:$0xff]
    %v1027 = vld [vmem:[#allocation10 + $0x40] sm:$0xff]
    %v1028 = vld [vmem:[#allocation10 + $0x48] sm:$0xff]
    %v1029 = vld [vmem:[#allocation10 + $0x50] sm:$0xff]
    %v1030 = vld [vmem:[#allocation10 + $0x58] sm:$0xff]
    %v1031 = vld [vmem:[#allocation10 + $0x60] sm:$0xff]
    %v1032 = vld [vmem:[#allocation10 + $0x68] sm:$0xff]
    %v1033 = vld [vmem:[#allocation10 + $0x70] sm:$0xff]
    %v1034 = vld [vmem:[#allocation10 + $0x78] sm:$0xff]
    %v1035 = vld [vmem:[#allocation10 + $0x80] sm:$0xff]
    %v1036 = vld [vmem:[#allocation10 + $0x88] sm:$0xff]
    %v1037 = vld [vmem:[#allocation10 + $0x90] sm:$0xff]
    %v1038 = vld [vmem:[#allocation10 + $0x98] sm:$0xff]
    %v1039 = vld [vmem:[#allocation10 + $0xa0] sm:$0xff]
    %v1040 = vld [vmem:[#allocation10 + $0xa8] sm:$0xff]
    %v1041 = vld [vmem:[#allocation10 + $0xb0] sm:$0xff]
    %v1042 = vld [vmem:[#allocation10 + $0xb8] sm:$0xff]
    %v1043 = vld [vmem:[#allocation10 + $0xc0] sm:$0xff]
    %v1044 = vld [vmem:[#allocation10 + $0xc8] sm:$0xff]
    %v1045 = vld [vmem:[#allocation10 + $0xd0] sm:$0xff]
    %v1046 = vld [vmem:[#allocation10 + $0xd8] sm:$0xff]
    %v1047 = vld [vmem:[#allocation10 + $0xe0] sm:$0xff]
    %v1048 = vld [vmem:[#allocation10 + $0xe8] sm:$0xff]
    %v1049 = vld [vmem:[#allocation10 + $0xf0] sm:$0xff]
    %v1050 = vld [vmem:[#allocation10 + $0xf8] sm:$0xff]
    %v1051 = vld [vmem:[%s6] sm:$0x1]
    %v1053 = vlaneseq
    %v1054 = vshrl.u32 %v1053, 7
    %v1055 = vsub.s32 0, %v1054
    %v1056 = vrot.slane %v1051, %v1055
    %1058 = vmatprep.subr.mxu0 0.0
    %1059 = vmatpush1.msra.mxu0 %v1019
    %1060 = vmatprep.subr.mxu0 0.0
    %1061 = vmatpush1.msra.mxu0 %v1020
    %1062 = vmatprep.subr.mxu0 0.0
    %1063 = vmatpush1.msra.mxu0 %v1021
    %1064 = vmatprep.subr.mxu0 0.0
    %1065 = vmatpush1.msra.mxu0 %v1022
    %1066 = vmatprep.subr.mxu0 0.0
    %1067 = vmatpush1.msra.mxu0 %v1023
    %1068 = vmatprep.subr.mxu0 0.0
    %1069 = vmatpush1.msra.mxu0 %v1024
    %1070 = vmatprep.subr.mxu0 0.0
    %1071 = vmatpush1.msra.mxu0 %v1025
    %1072 = vmatprep.subr.mxu0 0.0
    %1073 = vmatpush1.msra.mxu0 %v1026
    %1074 = vmatprep.subr.mxu0 0.0
    %1075 = vmatpush1.msra.mxu0 %v1027
    %1076 = vmatprep.subr.mxu0 0.0
    %1077 = vmatpush1.msra.mxu0 %v1028
    %1078 = vmatprep.subr.mxu0 0.0
    %1079 = vmatpush1.msra.mxu0 %v1029
    %1080 = vmatprep.subr.mxu0 0.0
    %1081 = vmatpush1.msra.mxu0 %v1030
    %1082 = vmatprep.subr.mxu0 0.0
    %1083 = vmatpush1.msra.mxu0 %v1031
    %1084 = vmatprep.subr.mxu0 0.0
    %1085 = vmatpush1.msra.mxu0 %v1032
    %1086 = vmatprep.subr.mxu0 0.0
    %1087 = vmatpush1.msra.mxu0 %v1033
    %1088 = vmatprep.subr.mxu0 0.0
    %1089 = vmatpush1.msra.mxu0 %v1034
    %1090 = vmatprep.subr.mxu0 0.0
    %1091 = vmatpush1.msra.mxu0 %v1035
    %1092 = vmatprep.subr.mxu0 0.0
    %1093 = vmatpush1.msra.mxu0 %v1036
    %1094 = vmatprep.subr.mxu0 0.0
    %1095 = vmatpush1.msra.mxu0 %v1037
    %1096 = vmatprep.subr.mxu0 0.0
    %1097 = vmatpush1.msra.mxu0 %v1038
    %1098 = vmatprep.subr.mxu0 0.0
    %1099 = vmatpush1.msra.mxu0 %v1039
    %1100 = vmatprep.subr.mxu0 0.0
    %1101 = vmatpush1.msra.mxu0 %v1040
    %1102 = vmatprep.subr.mxu0 0.0
    %1103 = vmatpush1.msra.mxu0 %v1041
    %1104 = vmatprep.subr.mxu0 0.0
    %1105 = vmatpush1.msra.mxu0 %v1042
    %1106 = vmatprep.subr.mxu0 0.0
    %1107 = vmatpush1.msra.mxu0 %v1043
    %1108 = vmatprep.subr.mxu0 0.0
    %1109 = vmatpush1.msra.mxu0 %v1044
    %1110 = vmatprep.subr.mxu0 0.0
    %1111 = vmatpush1.msra.mxu0 %v1045
    %1112 = vmatprep.subr.mxu0 0.0
    %1113 = vmatpush1.msra.mxu0 %v1046
    %1114 = vmatprep.subr.mxu0 0.0
    %1115 = vmatpush1.msra.mxu0 %v1047
    %1116 = vmatprep.subr.mxu0 0.0
    %1117 = vmatpush1.msra.mxu0 %v1048
    %1118 = vmatprep.subr.mxu0 0.0
    %1119 = vmatpush1.msra.mxu0 %v1049
    %1120 = vmatprep.subr.mxu0 0.0
    %1121 = vmatpush1.msra.mxu0 %v1050
    %1122 = vmatprep.mubr.f32.mxu0 %v1018
    %1123 = vmatmul.mubr.f32.gmra.mrb[0].mxu0 %v1017
    %v1124 = vpop.f32.mrb[0].mxu0
    %v1125 = vadd.f32 %v1056, %v1124
    %v1126 = vpop.f32.mrb[0].mxu0
    %1127 = vdwg.mxu0
    %v1128 = vld [vmem:[%s7] sm:$0x1]
    %vm1129 = vcmp.ne.f32.partialorder %v1128, 0.0
    %v1130 = vmax.f32 %v1125, 0.0
    %v1131 = vsel %vm1129, 1, 0
    %v1132 = vlaneseq
    %v1133 = vshrl.u32 %v1132, 7
    %v1134 = vsub.s32 0, %v1133
    %v1135 = vrot.slane %v1131, %v1134
    %vm1136 = vcmp.eq.s32.totalorder %v1135, 1
    %v1137 = vsel %vm1136, %v1130, %v1125
    %1138 = vst [vmem:[#allocation11] sm:$0xff] %v1137
    // Predicated region
    $region54: #{tpu_custom_call.1} parent=1 // pred_check
      _
    $region55: #{tpu_custom_call.1} parent=1 // pred_check_branch
      %1140 = sbr.rel (0) target = $region57
    $region56: #{tpu_custom_call.1} parent=1 // pred_region
      %s1142 = ssub.s32 128, 128
      %1143 = vsyncadd [#allocation4], %s1142
      %s1145 = sshll.u32 [#allocation11], 4
      %s1146 = int_to_ptr.vmem [resolvable:$true] %s1145
      %1148 = dma.vmem_to_hbm [thread:$0]  %s1146, 128, %s8, [#allocation4]
    $region57: #{tpu_custom_call.1} parent=1 // pred_fallthru
      _
    // Predicated region
    $region58: #{tpu_custom_call.1} parent=1 // pred_check
      _
    $region59: #{tpu_custom_call.1} parent=1 // pred_check_branch
      %1150 = sbr.rel (0) target = $region61
    $region60: #{tpu_custom_call.1} parent=1 // pred_region
      %1151 = dma.done [#allocation4], 128
    $region61: #{tpu_custom_call.1} parent=1 // pred_fallthru
      _
    %1152 = vsyncpa [#allocation3], 1
    %1153 = vsyncpa [#allocation6], 1
    %1154 = vsyncpa [#allocation9], 1
    %1155 = vsyncpa [#allocation4], 1

</llo_original>
